<compile_context>
chip_gen: v6e
topology: v6e:2x2x1
jax: 0.10.0
libtpu: 0.0.40
codegen_flags: <defaults>
</compile_context>

<pallas_src>
import functools
import math

import jax
import jax.numpy as jnp
from jax import lax
from jax.experimental import pallas as pl
from jax.experimental.pallas import tpu as pltpu

BN_EPS = 1e-5


def _predictor_kernel(x_ref, w1_ref, b1_ref, g1_ref, be1_ref,
                      w2_ref, b2_ref, g2_ref, be2_ref, o_ref, *, latent):
    """Shared MLP, run once: Linear->ReLU->BN->Linear->ReLU->BN."""
    x = x_ref[...]                                   # (B, Cp) bf16
    inv_b = 1.0 / x.shape[0]                         # static batch size

    # ---- Linear(C, C) + ReLU (bf16 MXU inputs, f32 accumulate) -------------
    h = jnp.dot(x, w1_ref[...], preferred_element_type=jnp.float32) + b1_ref[...]
    h = jnp.maximum(h, 0.0)

    # ---- BatchNorm1d(C): single-pass stats, fused scale/shift apply --------
    s1 = jnp.sum(h, axis=0, keepdims=True)
    s2 = jnp.sum(h * h, axis=0, keepdims=True)
    mu = s1 * inv_b
    var = jnp.maximum(s2 * inv_b - mu * mu, 0.0)     # biased var, clamped >= 0
    scale = g1_ref[...] * lax.rsqrt(var + BN_EPS)
    shift = be1_ref[...] - mu * scale
    h = h * scale + shift

    # ---- Linear(C, L) + ReLU -------------------------------------------------
    y = jnp.dot(h.astype(jnp.bfloat16), w2_ref[...],
                preferred_element_type=jnp.float32) + b2_ref[...]
    y = jnp.maximum(y, 0.0)

    # ---- BatchNorm1d(L) --------------------------------------------------------
    s1 = jnp.sum(y, axis=0, keepdims=True)
    s2 = jnp.sum(y * y, axis=0, keepdims=True)
    mu = s1 * inv_b
    var = jnp.maximum(s2 * inv_b - mu * mu, 0.0)
    scale = g2_ref[...] * lax.rsqrt(var + BN_EPS)
    shift = be2_ref[...] - mu * scale
    y = y * scale + shift                            # (B, Lp)

    # Emit the real (B, L) slab directly; at ~1 vreg the masked store is
    # negligible and it removes the wrapper-side slice kernel entirely.
    o_ref[...] = y[:, :latent].astype(o_ref.dtype)


def _round_up(n, m):
    return ((n + m - 1) // m) * m


def _lane_align(n):
    # 128 is enough for small dims; 256-align production-sized dims so the
    # 2x256^2 MXUs on v6e/v7x are fully fed per push.
    return _round_up(n, 256 if n > 128 else 128)


def _run_mlp(x, params, latent_size):
    """Run the shared MLP once -> (B, latent_size).  Only `x` is padded here;
    all parameters were padded / cast once in `init_params`."""
    B, C = x.shape
    Cp = params["w1"].shape[0]
    xp = jnp.pad(x, ((0, 0), (0, Cp - C))).astype(jnp.bfloat16)

    vmem = pl.BlockSpec(memory_space=pltpu.MemorySpace.VMEM)
    return pl.pallas_call(
        functools.partial(_predictor_kernel, latent=latent_size),
        out_shape=jax.ShapeDtypeStruct((B, latent_size), jnp.float32),
        in_specs=[vmem] * 9,
        out_specs=vmem,
    )(xp, params["w1"], params["b1"], params["g1"], params["be1"],
      params["w2"], params["b2"], params["g2"], params["be2"])


def predictor_forward(x, params, timesteps, latent_size, timestep=None):
    """Mirror of Predictor.forward(x, timestep).

    All timesteps share one parameter set (the ModuleList is built with
    `[...] * timesteps`), so one MLP pass suffices for every timestep.
    # TODO(synk): if per-timestep parameters are ever introduced, the integer
    # `timestep` value must select its own parameter set instead of being
    # ignored here.
    """
    y = _run_mlp(x, params, latent_size)                         # (B, L)
    if timestep is None:
        return jnp.broadcast_to(y[None], (timesteps,) + y.shape)  # (T, B, L)
    return y                                                      # (B, L)


def init_params(key, context_size, latent_size):
    """Parameter init matching the module's __init__, pre-padded lane-dense.

    Linear weights: kaiming_normal (fan_in, relu), stored TRANSPOSED [in, out],
                    zero-padded to lane-aligned widths, bf16.
    Linear biases:  PyTorch default uniform(+-1/sqrt(fan_in)), f32, padded 0.
    BatchNorm:      gamma=1, beta=0, f32, padded 0.

    Zero-padding is exact: padded feature columns stay identically 0 through
    Linear (zero weights/bias), ReLU and BN (mu=var=0, gamma/beta pad 0), so
    they never perturb the real columns or the batch statistics.
    """
    Cp = _lane_align(context_size)
    Lp = _lane_align(latent_size)
    pc, pl_ = Cp - context_size, Lp - latent_size

    k1, k2, k3, k4 = jax.random.split(key, 4)
    std = math.sqrt(2.0 / context_size)
    bound = 1.0 / math.sqrt(context_size)

    w1 = jax.random.normal(k1, (context_size, context_size), jnp.float32) * std
    b1 = jax.random.uniform(k2, (1, context_size), jnp.float32, -bound, bound)
    w2 = jax.random.normal(k3, (context_size, latent_size), jnp.float32) * std
    b2 = jax.random.uniform(k4, (1, latent_size), jnp.float32, -bound, bound)

    return {
        "w1": jnp.pad(w1, ((0, pc), (0, pc))).astype(jnp.bfloat16),
        "b1": jnp.pad(b1, ((0, 0), (0, pc))),
        "g1": jnp.pad(jnp.ones((1, context_size), jnp.float32), ((0, 0), (0, pc))),
        "be1": jnp.zeros((1, Cp), jnp.float32),
        "w2": jnp.pad(w2, ((0, pc), (0, pl_))).astype(jnp.bfloat16),
        "b2": jnp.pad(b2, ((0, 0), (0, pl_))),
        "g2": jnp.pad(jnp.ones((1, latent_size), jnp.float32), ((0, 0), (0, pl_))),
        "be2": jnp.zeros((1, Lp), jnp.float32),
    }


def _reference_forward(x, params, latent_size):
    """Plain-JAX reference (two-pass BN, same padded bf16 weights)."""
    C = x.shape[1]
    Cp = params["w1"].shape[0]
    xp = jnp.pad(x, ((0, 0), (0, Cp - C))).astype(jnp.bfloat16)

    h = jnp.dot(xp, params["w1"], preferred_element_type=jnp.float32) + params["b1"]
    h = jnp.maximum(h, 0.0)
    mu = h.mean(0, keepdims=True)
    var = ((h - mu) ** 2).mean(0, keepdims=True)
    h = params["g1"] * (h - mu) / jnp.sqrt(var + BN_EPS) + params["be1"]

    y = jnp.dot(h.astype(jnp.bfloat16), params["w2"],
                preferred_element_type=jnp.float32) + params["b2"]
    y = jnp.maximum(y, 0.0)
    mu = y.mean(0, keepdims=True)
    var = ((y - mu) ** 2).mean(0, keepdims=True)
    y = params["g2"] * (y - mu) / jnp.sqrt(var + BN_EPS) + params["be2"]
    return y[:, :latent_size]


if __name__ == "__main__":
    B, CONTEXT, LATENT, TIMESTEPS = 8, 32, 16, 4

    key = jax.random.PRNGKey(0)
    kx, kp = jax.random.split(key)
    x = jax.random.normal(kx, (B, CONTEXT), jnp.float32)
    params = init_params(kp, CONTEXT, LATENT)

    # timestep=None path: stacked predictions (T, B, L)
    stacked = predictor_forward(x, params, TIMESTEPS, LATENT, timestep=None)
    stacked = jax.block_until_ready(stacked)
    assert stacked.shape == (TIMESTEPS, B, LATENT), stacked.shape

    # integer-timestep path: (B, L)
    single = predictor_forward(x, params, TIMESTEPS, LATENT, timestep=2)
    single = jax.block_until_ready(single)
    assert single.shape == (B, LATENT), single.shape

    # correctness vs plain-JAX reference (bf16 matmuls -> modest tolerance)
    ref = _reference_forward(x, params, LATENT)
    assert jnp.allclose(single, ref, atol=5e-3, rtol=5e-3)
    assert jnp.allclose(stacked[0], ref, atol=5e-3, rtol=5e-3)
    # all timesteps share one parameter set -> identical predictions
    assert jnp.allclose(stacked[0], stacked[TIMESTEPS - 1])
    assert jnp.allclose(stacked[0], single)

    print("KERNEL_OK")
</pallas_src>

<mosaic_0001>
module attributes {stable_mosaic.version = 11 : i64} {
  func.func @_predictor_kernel(%arg0: memref<8x128xbf16, #tpu.memory_space<vmem>>, %arg1: memref<128x128xbf16, #tpu.memory_space<vmem>>, %arg2: memref<1x128xf32, #tpu.memory_space<vmem>>, %arg3: memref<1x128xf32, #tpu.memory_space<vmem>>, %arg4: memref<1x128xf32, #tpu.memory_space<vmem>>, %arg5: memref<128x128xbf16, #tpu.memory_space<vmem>>, %arg6: memref<1x128xf32, #tpu.memory_space<vmem>>, %arg7: memref<1x128xf32, #tpu.memory_space<vmem>>, %arg8: memref<1x128xf32, #tpu.memory_space<vmem>>, %arg9: memref<8x16xf32, #tpu.memory_space<vmem>>) attributes {dimension_semantics = [], scalar_prefetch = 0 : i64, scratch_operands = 0 : i64, tpu.core_type = #tpu.core_type<tc>} {
    %c0 = arith.constant 0 : index
    %c0_0 = arith.constant 0 : index
    %0 = vector.load %arg0[%c0, %c0_0] : memref<8x128xbf16, #tpu.memory_space<vmem>>, vector<8x128xbf16>
    %c0_1 = arith.constant 0 : index
    %c0_2 = arith.constant 0 : index
    %1 = vector.load %arg1[%c0_1, %c0_2] : memref<128x128xbf16, #tpu.memory_space<vmem>>, vector<128x128xbf16>
    %cst = arith.constant dense<0.000000e+00> : vector<8x128xf32>
    %2 = tpu.matmul %0, %1, %cst {dimension_numbers = #tpu.dot_dimension_numbers<[1], [0], [0], [1], [0, 0, 1, 1], [], []>} : vector<8x128xbf16>, vector<128x128xbf16>, vector<8x128xf32> -> vector<8x128xf32>
    %c0_3 = arith.constant 0 : index
    %c0_4 = arith.constant 0 : index
    %3 = vector.load %arg2[%c0_3, %c0_4] : memref<1x128xf32, #tpu.memory_space<vmem>>, vector<1x128xf32>
    %4 = vector.broadcast %3 : vector<1x128xf32> to vector<8x128xf32>
    %5 = arith.addf %2, %4 : vector<8x128xf32>
    %cst_5 = arith.constant 0.000000e+00 : f32
    %6 = vector.broadcast %cst_5 : f32 to vector<8x128xf32>
    %7 = arith.maximumf %5, %6 : vector<8x128xf32>
    %cst_6 = arith.constant dense<0.000000e+00> : vector<128xf32>
    %8 = vector.multi_reduction <add>, %7, %cst_6 [0] : vector<8x128xf32> to vector<128xf32>
    %9 = vector.shape_cast %8 : vector<128xf32> to vector<1x128xf32>
    %10 = arith.mulf %7, %7 : vector<8x128xf32>
    %cst_7 = arith.constant dense<0.000000e+00> : vector<128xf32>
    %11 = vector.multi_reduction <add>, %10, %cst_7 [0] : vector<8x128xf32> to vector<128xf32>
    %12 = vector.shape_cast %11 : vector<128xf32> to vector<1x128xf32>
    %cst_8 = arith.constant 1.250000e-01 : f32
    %13 = vector.broadcast %cst_8 : f32 to vector<1x128xf32>
    %14 = arith.mulf %9, %13 : vector<1x128xf32>
    %cst_9 = arith.constant 1.250000e-01 : f32
    %15 = vector.broadcast %cst_9 : f32 to vector<1x128xf32>
    %16 = arith.mulf %12, %15 : vector<1x128xf32>
    %17 = arith.mulf %14, %14 : vector<1x128xf32>
    %18 = arith.subf %16, %17 : vector<1x128xf32>
    %cst_10 = arith.constant 0.000000e+00 : f32
    %19 = vector.broadcast %cst_10 : f32 to vector<1x128xf32>
    %20 = arith.maximumf %18, %19 : vector<1x128xf32>
    %c0_11 = arith.constant 0 : index
    %c0_12 = arith.constant 0 : index
    %21 = vector.load %arg3[%c0_11, %c0_12] : memref<1x128xf32, #tpu.memory_space<vmem>>, vector<1x128xf32>
    %cst_13 = arith.constant 9.99999974E-6 : f32
    %22 = vector.broadcast %cst_13 : f32 to vector<1x128xf32>
    %23 = arith.addf %20, %22 : vector<1x128xf32>
    %24 = math.rsqrt %23 : vector<1x128xf32>
    %25 = arith.mulf %21, %24 : vector<1x128xf32>
    %c0_14 = arith.constant 0 : index
    %c0_15 = arith.constant 0 : index
    %26 = vector.load %arg4[%c0_14, %c0_15] : memref<1x128xf32, #tpu.memory_space<vmem>>, vector<1x128xf32>
    %27 = arith.mulf %14, %25 : vector<1x128xf32>
    %28 = arith.subf %26, %27 : vector<1x128xf32>
    %29 = vector.broadcast %25 : vector<1x128xf32> to vector<8x128xf32>
    %30 = arith.mulf %7, %29 : vector<8x128xf32>
    %31 = vector.broadcast %28 : vector<1x128xf32> to vector<8x128xf32>
    %32 = arith.addf %30, %31 : vector<8x128xf32>
    %33 = arith.truncf %32 : vector<8x128xf32> to vector<8x128xbf16>
    %c0_16 = arith.constant 0 : index
    %c0_17 = arith.constant 0 : index
    %34 = vector.load %arg5[%c0_16, %c0_17] : memref<128x128xbf16, #tpu.memory_space<vmem>>, vector<128x128xbf16>
    %cst_18 = arith.constant dense<0.000000e+00> : vector<8x128xf32>
    %35 = tpu.matmul %33, %34, %cst_18 {dimension_numbers = #tpu.dot_dimension_numbers<[1], [0], [0], [1], [0, 0, 1, 1], [], []>} : vector<8x128xbf16>, vector<128x128xbf16>, vector<8x128xf32> -> vector<8x128xf32>
    %c0_19 = arith.constant 0 : index
    %c0_20 = arith.constant 0 : index
    %36 = vector.load %arg6[%c0_19, %c0_20] : memref<1x128xf32, #tpu.memory_space<vmem>>, vector<1x128xf32>
    %37 = vector.broadcast %36 : vector<1x128xf32> to vector<8x128xf32>
    %38 = arith.addf %35, %37 : vector<8x128xf32>
    %cst_21 = arith.constant 0.000000e+00 : f32
    %39 = vector.broadcast %cst_21 : f32 to vector<8x128xf32>
    %40 = arith.maximumf %38, %39 : vector<8x128xf32>
    %cst_22 = arith.constant dense<0.000000e+00> : vector<128xf32>
    %41 = vector.multi_reduction <add>, %40, %cst_22 [0] : vector<8x128xf32> to vector<128xf32>
    %42 = vector.shape_cast %41 : vector<128xf32> to vector<1x128xf32>
    %43 = arith.mulf %40, %40 : vector<8x128xf32>
    %cst_23 = arith.constant dense<0.000000e+00> : vector<128xf32>
    %44 = vector.multi_reduction <add>, %43, %cst_23 [0] : vector<8x128xf32> to vector<128xf32>
    %45 = vector.shape_cast %44 : vector<128xf32> to vector<1x128xf32>
    %cst_24 = arith.constant 1.250000e-01 : f32
    %46 = vector.broadcast %cst_24 : f32 to vector<1x128xf32>
    %47 = arith.mulf %42, %46 : vector<1x128xf32>
    %cst_25 = arith.constant 1.250000e-01 : f32
    %48 = vector.broadcast %cst_25 : f32 to vector<1x128xf32>
    %49 = arith.mulf %45, %48 : vector<1x128xf32>
    %50 = arith.mulf %47, %47 : vector<1x128xf32>
    %51 = arith.subf %49, %50 : vector<1x128xf32>
    %cst_26 = arith.constant 0.000000e+00 : f32
    %52 = vector.broadcast %cst_26 : f32 to vector<1x128xf32>
    %53 = arith.maximumf %51, %52 : vector<1x128xf32>
    %c0_27 = arith.constant 0 : index
    %c0_28 = arith.constant 0 : index
    %54 = vector.load %arg7[%c0_27, %c0_28] : memref<1x128xf32, #tpu.memory_space<vmem>>, vector<1x128xf32>
    %cst_29 = arith.constant 9.99999974E-6 : f32
    %55 = vector.broadcast %cst_29 : f32 to vector<1x128xf32>
    %56 = arith.addf %53, %55 : vector<1x128xf32>
    %57 = math.rsqrt %56 : vector<1x128xf32>
    %58 = arith.mulf %54, %57 : vector<1x128xf32>
    %c0_30 = arith.constant 0 : index
    %c0_31 = arith.constant 0 : index
    %59 = vector.load %arg8[%c0_30, %c0_31] : memref<1x128xf32, #tpu.memory_space<vmem>>, vector<1x128xf32>
    %60 = arith.mulf %47, %58 : vector<1x128xf32>
    %61 = arith.subf %59, %60 : vector<1x128xf32>
    %62 = vector.broadcast %58 : vector<1x128xf32> to vector<8x128xf32>
    %63 = arith.mulf %40, %62 : vector<8x128xf32>
    %64 = vector.broadcast %61 : vector<1x128xf32> to vector<8x128xf32>
    %65 = arith.addf %63, %64 : vector<8x128xf32>
    %66 = vector.extract_strided_slice %65 {offsets = [0, 0], sizes = [8, 16], strides = [1, 1]} : vector<8x128xf32> to vector<8x16xf32>
    %c0_32 = arith.constant 0 : index
    %c0_33 = arith.constant 0 : index
    %67 = vector.load %arg9[%c0_32, %c0_33] : memref<8x16xf32, #tpu.memory_space<vmem>>, vector<8x16xf32>
    tpu.vector_store %arg9[%c0_32, %c0_33], %66 {strides = array<i32>} : memref<8x16xf32, #tpu.memory_space<vmem>>, vector<8x16xf32>,
    return
  }
}

</mosaic_0001>

<llo_original>
// kernel: tpu_custom_call.1
$region0: #{tpu_custom_call.1}
  #allocation0 [shape = 'u32[]', space=smem, size = 0x4, offset = 0x4, fixed_abs, tag = 'smem constant byte address 0x4 - core index']
  #allocation1 [shape = 'u32[144,128]{1,0:T(1,128)}', space=vmem, size = 0x12000, scoped, tag = 'internal scratch']
  %s0 = inlined_call_operand.hbm [shape: bf16[8,128], index: 0, kind: input, shape index: {}]
  %s1 = inlined_call_operand.hbm [shape: bf16[128,128], index: 1, kind: input, shape index: {}]
  %s2 = inlined_call_operand.vmem [shape: f32[1,128], index: 2, kind: input, shape index: {}]
  %s3 = inlined_call_operand.vmem [shape: f32[1,128], index: 3, kind: input, shape index: {}]
  %s4 = inlined_call_operand.vmem [shape: f32[1,128], index: 4, kind: input, shape index: {}]
  %s5 = inlined_call_operand.hbm [shape: bf16[128,128], index: 5, kind: input, shape index: {}]
  %s6 = inlined_call_operand.vmem [shape: f32[1,128], index: 6, kind: input, shape index: {}]
  %s7 = inlined_call_operand.vmem [shape: f32[1,128], index: 7, kind: input, shape index: {}]
  %s8 = inlined_call_operand.vmem [shape: f32[1,128], index: 8, kind: input, shape index: {}]
  %s9 = inlined_call_operand.hbm [shape: f32[8,16], index: 9, kind: output, shape index: {}]
  %s10 = sld [smem:[#allocation0]]
  $region58: #{tpu_custom_call.1} parent=0
    _
  %s12 = ssub.s32 1, %s10
  %s13 = scalar_select 0, %s12, %s10
  $region1: #{tpu_custom_call.1} parent=0
    #allocation2 [shape = 'u8[2048]{0}', space=vmem, size = 0x800, scoped, tag = 'input window, operand 0, single buffered']
    #allocation3 [shape = 's32[1]{0}', space=sflag, size = 0x4, scoped, tag = 'scoped memory for tpu_custom_call.1']
    #allocation4 [shape = 's32[1]{0}', space=sflag, size = 0x4, scoped, tag = 'scoped memory for tpu_custom_call.1']
    #allocation5 [shape = 'u8[32768]{0}', space=vmem, size = 0x8000, scoped, tag = 'input window, operand 1, single buffered']
    #allocation6 [shape = 's32[1]{0}', space=sflag, size = 0x4, scoped, tag = 'scoped memory for tpu_custom_call.1']
    #allocation7 [shape = 'u8[32768]{0}', space=vmem, size = 0x8000, scoped, tag = 'input window, operand 5, single buffered']
    #allocation8 [shape = 'u8[4096]{0}', space=vmem, size = 0x1000, scoped, tag = 'output window, operand 0, single buffered']
    %14 = vsyncpa [#allocation3], 0
    %15 = vsyncpa [#allocation6], 0
    %16 = vsyncpa [#allocation4], 0
    // Predicated region
    $region2: #{tpu_custom_call.1} parent=1 // pred_check
      _
    $region3: #{tpu_custom_call.1} parent=1 // pred_check_branch
      %18 = sbr.rel (0) target = $region5
    $region4: #{tpu_custom_call.1} parent=1 // pred_region
      %s20 = ssub.s32 64, 64
      %21 = vsyncadd [#allocation3], %s20
      %s23 = sshll.u32 [#allocation2], 4
      %s24 = int_to_ptr.vmem [resolvable:$true] %s23
      %26 = dma.hbm_to_vmem [thread:$0]  %s0, 64, %s24, [#allocation3]
    $region5: #{tpu_custom_call.1} parent=1 // pred_fallthru
      _
    // Predicated region
    $region6: #{tpu_custom_call.1} parent=1 // pred_check
      _
    $region7: #{tpu_custom_call.1} parent=1 // pred_check_branch
      %28 = sbr.rel (0) target = $region9
    $region8: #{tpu_custom_call.1} parent=1 // pred_region
      %s30 = ssub.s32 1024, 1024
      %31 = vsyncadd [#allocation6], %s30
      %s32 = sshll.u32 [#allocation5], 4
      %s33 = int_to_ptr.vmem [resolvable:$true] %s32
      %38 = dma.hbm_to_vmem [thread:$0]  %s1, 1024, %s33, [#allocation6], 64, 64, 4
    $region9: #{tpu_custom_call.1} parent=1 // pred_fallthru
      _
    // Predicated region
    $region10: #{tpu_custom_call.1} parent=1 // pred_check
      _
    $region11: #{tpu_custom_call.1} parent=1 // pred_check_branch
      %40 = sbr.rel (0) target = $region13
    $region12: #{tpu_custom_call.1} parent=1 // pred_region
      _
    $region13: #{tpu_custom_call.1} parent=1 // pred_fallthru
      _
    // Predicated region
    $region14: #{tpu_custom_call.1} parent=1 // pred_check
      _
    $region15: #{tpu_custom_call.1} parent=1 // pred_check_branch
      %42 = sbr.rel (0) target = $region17
    $region16: #{tpu_custom_call.1} parent=1 // pred_region
      _
    $region17: #{tpu_custom_call.1} parent=1 // pred_fallthru
      _
    // Predicated region
    $region18: #{tpu_custom_call.1} parent=1 // pred_check
      _
    $region19: #{tpu_custom_call.1} parent=1 // pred_check_branch
      %44 = sbr.rel (0) target = $region21
    $region20: #{tpu_custom_call.1} parent=1 // pred_region
      _
    $region21: #{tpu_custom_call.1} parent=1 // pred_fallthru
      _
    // Predicated region
    $region22: #{tpu_custom_call.1} parent=1 // pred_check
      _
    $region23: #{tpu_custom_call.1} parent=1 // pred_check_branch
      %46 = sbr.rel (0) target = $region25
    $region24: #{tpu_custom_call.1} parent=1 // pred_region
      %s48 = ssub.s32 1024, 1024
      %49 = vsyncadd [#allocation6], %s48
      %s50 = sshll.u32 [#allocation7], 4
      %s51 = int_to_ptr.vmem [resolvable:$true] %s50
      %56 = dma.hbm_to_vmem [thread:$0]  %s5, 1024, %s51, [#allocation6], 64, 64, 4
    $region25: #{tpu_custom_call.1} parent=1 // pred_fallthru
      _
    // Predicated region
    $region26: #{tpu_custom_call.1} parent=1 // pred_check
      _
    $region27: #{tpu_custom_call.1} parent=1 // pred_check_branch
      %58 = sbr.rel (0) target = $region29
    $region28: #{tpu_custom_call.1} parent=1 // pred_region
      _
    $region29: #{tpu_custom_call.1} parent=1 // pred_fallthru
      _
    // Predicated region
    $region30: #{tpu_custom_call.1} parent=1 // pred_check
      _
    $region31: #{tpu_custom_call.1} parent=1 // pred_check_branch
      %60 = sbr.rel (0) target = $region33
    $region32: #{tpu_custom_call.1} parent=1 // pred_region
      _
    $region33: #{tpu_custom_call.1} parent=1 // pred_fallthru
      _
    // Predicated region
    $region34: #{tpu_custom_call.1} parent=1 // pred_check
      _
    $region35: #{tpu_custom_call.1} parent=1 // pred_check_branch
      %62 = sbr.rel (0) target = $region37
    $region36: #{tpu_custom_call.1} parent=1 // pred_region
      _
    $region37: #{tpu_custom_call.1} parent=1 // pred_fallthru
      _
    // Predicated region
    $region38: #{tpu_custom_call.1} parent=1 // pred_check
      _
    $region39: #{tpu_custom_call.1} parent=1 // pred_check_branch
      %64 = sbr.rel (0) target = $region41
    $region40: #{tpu_custom_call.1} parent=1 // pred_region
      %65 = dma.done [#allocation3], 64
    $region41: #{tpu_custom_call.1} parent=1 // pred_fallthru
      _
    // Predicated region
    $region42: #{tpu_custom_call.1} parent=1 // pred_check
      _
    $region43: #{tpu_custom_call.1} parent=1 // pred_check_branch
      %67 = sbr.rel (0) target = $region45
    $region44: #{tpu_custom_call.1} parent=1 // pred_region
      %68 = dma.done [#allocation6], 1024
    $region45: #{tpu_custom_call.1} parent=1 // pred_fallthru
      _
    // Predicated region
    $region46: #{tpu_custom_call.1} parent=1 // pred_check
      _
    $region47: #{tpu_custom_call.1} parent=1 // pred_check_branch
      %70 = sbr.rel (0) target = $region49
    $region48: #{tpu_custom_call.1} parent=1 // pred_region
      %71 = dma.done [#allocation6], 1024
    $region49: #{tpu_custom_call.1} parent=1 // pred_fallthru
      _
    %v73 = vld [vmem:[#allocation2] sm:$0xf]
    %v74 = vld [vmem:[#allocation5] sm:$0xf]
    %v75 = vld [vmem:[#allocation5 + $0x4] sm:$0xf]
    %v76 = vld [vmem:[#allocation5 + $0x8] sm:$0xf]
    %v77 = vld [vmem:[#allocation5 + $0xc] sm:$0xf]
    %v78 = vld [vmem:[#allocation5 + $0x10] sm:$0xf]
    %v79 = vld [vmem:[#allocation5 + $0x14] sm:$0xf]
    %v80 = vld [vmem:[#allocation5 + $0x18] sm:$0xf]
    %v81 = vld [vmem:[#allocation5 + $0x1c] sm:$0xf]
    %v82 = vld [vmem:[#allocation5 + $0x20] sm:$0xf]
    %v83 = vld [vmem:[#allocation5 + $0x24] sm:$0xf]
    %v84 = vld [vmem:[#allocation5 + $0x28] sm:$0xf]
    %v85 = vld [vmem:[#allocation5 + $0x2c] sm:$0xf]
    %v86 = vld [vmem:[#allocation5 + $0x30] sm:$0xf]
    %v87 = vld [vmem:[#allocation5 + $0x34] sm:$0xf]
    %v88 = vld [vmem:[#allocation5 + $0x38] sm:$0xf]
    %v89 = vld [vmem:[#allocation5 + $0x3c] sm:$0xf]
    %v90 = vld [vmem:[%s2] sm:$0x1]
    %v92 = vlaneseq
    %v93 = vshrl.u32 %v92, 7
    %v94 = vsub.s32 0, %v93
    %v95 = vrot.slane %v90, %v94
    %v113 = vunpack.c.l.b16 %v74
    %v114 = vunpack.c.l.b16 %v75
    %v115 = vunpack.c.l.b16 %v76
    %v116 = vunpack.c.l.b16 %v77
    %v117 = vunpack.c.l.b16 %v78
    %v118 = vunpack.c.l.b16 %v79
    %v119 = vunpack.c.l.b16 %v80
    %v120 = vunpack.c.l.b16 %v81
    %v121 = vunpack.c.l.b16 %v82
    %v122 = vunpack.c.l.b16 %v83
    %v123 = vunpack.c.l.b16 %v84
    %v124 = vunpack.c.l.b16 %v85
    %v125 = vunpack.c.l.b16 %v86
    %v126 = vunpack.c.l.b16 %v87
    %v127 = vunpack.c.l.b16 %v88
    %v128 = vunpack.c.l.b16 %v89
    %v129 = vpack.c.b16 %v114, %v113
    %v130 = vpack.c.b16 %v116, %v115
    %v131 = vpack.c.b16 %v118, %v117
    %v132 = vpack.c.b16 %v120, %v119
    %v133 = vpack.c.b16 %v122, %v121
    %v134 = vpack.c.b16 %v124, %v123
    %v135 = vpack.c.b16 %v126, %v125
    %v136 = vpack.c.b16 %v128, %v127
    %145 = vmatprep.subr.bf16.mxu0 0
    %146 = vmatpush1.bf16.msra.mxu0 %v136
    %147 = vmatprep.subr.bf16.mxu0 0
    %148 = vmatpush1.bf16.msra.mxu0 %v135
    %149 = vmatprep.subr.bf16.mxu0 0
    %150 = vmatpush1.bf16.msra.mxu0 %v134
    %151 = vmatprep.subr.bf16.mxu0 0
    %152 = vmatpush1.bf16.msra.mxu0 %v133
    %153 = vmatprep.subr.bf16.mxu0 0
    %154 = vmatpush1.bf16.msra.mxu0 %v132
    %155 = vmatprep.subr.bf16.mxu0 0
    %156 = vmatpush1.bf16.msra.mxu0 %v131
    %157 = vmatprep.subr.bf16.mxu0 0
    %158 = vmatpush1.bf16.msra.mxu0 %v130
    %159 = vmatprep.subr.bf16.mxu0 0
    %160 = vmatpush1.bf16.msra.mxu0 %v129
    %161 = vmatprep.subr.bf16.mxu0 0
    %162 = vmatpush2.bf16.msra.mxu0 0
    %163 = vmatprep.subr.bf16.mxu0 0
    %164 = vmatpush2.bf16.msra.mxu0 0
    %165 = vmatprep.subr.bf16.mxu0 0
    %166 = vmatpush2.bf16.msra.mxu0 0
    %167 = vmatprep.subr.bf16.mxu0 0
    %168 = vmatpush2.bf16.msra.mxu0 0
    %169 = vmatprep.subr.bf16.mxu0 0
    %170 = vmatpush2.bf16.msra.mxu0 0
    %171 = vmatprep.subr.bf16.mxu0 0
    %172 = vmatpush2.bf16.msra.mxu0 0
    %173 = vmatprep.subr.bf16.mxu0 0
    %174 = vmatpush2.bf16.msra.mxu0 0
    %175 = vmatprep.subr.bf16.mxu0 0
    %176 = vmatpush2.bf16.msra.mxu0 0
    %177 = vmatprep.mubr.bf16.mxu0 0
    %178 = vmatmul.mubr.bf16.gmra.mxu0 %v73
    %v179 = vpop.f32.mrf.mxu0
    %v180 = vadd.f32 %v95, %v179
    %v181 = vpop.f32.mrf.mxu0
    %v182 = vpop.f32.mrf.mxu0
    %v183 = vpop.f32.mrf.mxu0
    %184 = vdwg.mxu0
    %v185 = vmax.f32 %v180, 0.0
    %v186 = vrot.slane %v185, 4
    %v187 = vadd.f32 %v185, %v186
    %v188 = vrot.slane %v187, 2
    %v189 = vadd.f32 %v187, %v188
    %v190 = vrot.slane %v189, 1
    %v191 = vadd.f32 %v189, %v190
    %v192 = vmul.f32 %v185, %v185
    %v193 = vrot.slane %v192, 4
    %v194 = vadd.f32 %v192, %v193
    %v195 = vrot.slane %v194, 2
    %v196 = vadd.f32 %v194, %v195
    %v197 = vrot.slane %v196, 1
    %v198 = vadd.f32 %v196, %v197
    %v199 = vmul.f32 %v191, 0.125
    %v200 = vmul.f32 %v198, 0.125
    %v201 = vmul.f32 %v199, %v199
    %v202 = vsub.f32 %v200, %v201
    %v203 = vmax.f32 %v202, 0.0
    %v204 = vld [vmem:[%s3] sm:$0x1]
    %v205 = vadd.f32 %v203, 1e-05
    %v206 = vrsqrt.pop %v205
    %v207 = vmul.f32 %v204, %v206
    %v208 = vld [vmem:[%s4] sm:$0x1]
    %v209 = vmul.f32 %v199, %v207
    %v210 = vsub.f32 %v208, %v209
    %v212 = vlaneseq
    %v213 = vshrl.u32 %v212, 7
    %v214 = vsub.s32 0, %v213
    %v215 = vrot.slane %v207, %v214
    %v217 = vmul.f32 %v185, %v215
    %v219 = vlaneseq
    %v220 = vshrl.u32 %v219, 7
    %v221 = vsub.s32 0, %v220
    %v222 = vrot.slane %v210, %v221
    %v224 = vadd.f32 %v217, %v222
    %v225 = vpack.c.bf16 %v224, %v224
    %v226 = vld [vmem:[#allocation7] sm:$0xf]
    %v227 = vld [vmem:[#allocation7 + $0x4] sm:$0xf]
    %v228 = vld [vmem:[#allocation7 + $0x8] sm:$0xf]
    %v229 = vld [vmem:[#allocation7 + $0xc] sm:$0xf]
    %v230 = vld [vmem:[#allocation7 + $0x10] sm:$0xf]
    %v231 = vld [vmem:[#allocation7 + $0x14] sm:$0xf]
    %v232 = vld [vmem:[#allocation7 + $0x18] sm:$0xf]
    %v233 = vld [vmem:[#allocation7 + $0x1c] sm:$0xf]
    %v234 = vld [vmem:[#allocation7 + $0x20] sm:$0xf]
    %v235 = vld [vmem:[#allocation7 + $0x24] sm:$0xf]
    %v236 = vld [vmem:[#allocation7 + $0x28] sm:$0xf]
    %v237 = vld [vmem:[#allocation7 + $0x2c] sm:$0xf]
    %v238 = vld [vmem:[#allocation7 + $0x30] sm:$0xf]
    %v239 = vld [vmem:[#allocation7 + $0x34] sm:$0xf]
    %v240 = vld [vmem:[#allocation7 + $0x38] sm:$0xf]
    %v241 = vld [vmem:[#allocation7 + $0x3c] sm:$0xf]
    %v242 = vld [vmem:[%s6] sm:$0x1]
    %v244 = vlaneseq
    %v245 = vshrl.u32 %v244, 7
    %v246 = vsub.s32 0, %v245
    %v247 = vrot.slane %v242, %v246
    %v265 = vunpack.c.l.b16 %v226
    %v266 = vunpack.c.l.b16 %v227
    %v267 = vunpack.c.l.b16 %v228
    %v268 = vunpack.c.l.b16 %v229
    %v269 = vunpack.c.l.b16 %v230
    %v270 = vunpack.c.l.b16 %v231
    %v271 = vunpack.c.l.b16 %v232
    %v272 = vunpack.c.l.b16 %v233
    %v273 = vunpack.c.l.b16 %v234
    %v274 = vunpack.c.l.b16 %v235
    %v275 = vunpack.c.l.b16 %v236
    %v276 = vunpack.c.l.b16 %v237
    %v277 = vunpack.c.l.b16 %v238
    %v278 = vunpack.c.l.b16 %v239
    %v279 = vunpack.c.l.b16 %v240
    %v280 = vunpack.c.l.b16 %v241
    %v281 = vpack.c.b16 %v266, %v265
    %v282 = vpack.c.b16 %v268, %v267
    %v283 = vpack.c.b16 %v270, %v269
    %v284 = vpack.c.b16 %v272, %v271
    %v285 = vpack.c.b16 %v274, %v273
    %v286 = vpack.c.b16 %v276, %v275
    %v287 = vpack.c.b16 %v278, %v277
    %v288 = vpack.c.b16 %v280, %v279
    %297 = vmatprep.subr.bf16.mxu0 0
    %298 = vmatpush1.bf16.msra.mxu0 %v288
    %299 = vmatprep.subr.bf16.mxu0 0
    %300 = vmatpush1.bf16.msra.mxu0 %v287
    %301 = vmatprep.subr.bf16.mxu0 0
    %302 = vmatpush1.bf16.msra.mxu0 %v286
    %303 = vmatprep.subr.bf16.mxu0 0
    %304 = vmatpush1.bf16.msra.mxu0 %v285
    %305 = vmatprep.subr.bf16.mxu0 0
    %306 = vmatpush1.bf16.msra.mxu0 %v284
    %307 = vmatprep.subr.bf16.mxu0 0
    %308 = vmatpush1.bf16.msra.mxu0 %v283
    %309 = vmatprep.subr.bf16.mxu0 0
    %310 = vmatpush1.bf16.msra.mxu0 %v282
    %311 = vmatprep.subr.bf16.mxu0 0
    %312 = vmatpush1.bf16.msra.mxu0 %v281
    %313 = vmatprep.subr.bf16.mxu0 0
    %314 = vmatpush2.bf16.msra.mxu0 0
    %315 = vmatprep.subr.bf16.mxu0 0
    %316 = vmatpush2.bf16.msra.mxu0 0
    %317 = vmatprep.subr.bf16.mxu0 0
    %318 = vmatpush2.bf16.msra.mxu0 0
    %319 = vmatprep.subr.bf16.mxu0 0
    %320 = vmatpush2.bf16.msra.mxu0 0
    %321 = vmatprep.subr.bf16.mxu0 0
    %322 = vmatpush2.bf16.msra.mxu0 0
    %323 = vmatprep.subr.bf16.mxu0 0
    %324 = vmatpush2.bf16.msra.mxu0 0
    %325 = vmatprep.subr.bf16.mxu0 0
    %326 = vmatpush2.bf16.msra.mxu0 0
    %327 = vmatprep.subr.bf16.mxu0 0
    %328 = vmatpush2.bf16.msra.mxu0 0
    %329 = vmatprep.mubr.bf16.mxu0 0
    %330 = vmatmul.mubr.bf16.gmra.mxu0 %v225
    %v331 = vpop.f32.mrf.mxu0
    %v332 = vadd.f32 %v247, %v331
    %v333 = vpop.f32.mrf.mxu0
    %v334 = vpop.f32.mrf.mxu0
    %v335 = vpop.f32.mrf.mxu0
    %336 = vdwg.mxu0
    %v337 = vmax.f32 %v332, 0.0
    %v338 = vrot.slane %v337, 4
    %v339 = vadd.f32 %v337, %v338
    %v340 = vrot.slane %v339, 2
    %v341 = vadd.f32 %v339, %v340
    %v342 = vrot.slane %v341, 1
    %v343 = vadd.f32 %v341, %v342
    %v344 = vmul.f32 %v337, %v337
    %v345 = vrot.slane %v344, 4
    %v346 = vadd.f32 %v344, %v345
    %v347 = vrot.slane %v346, 2
    %v348 = vadd.f32 %v346, %v347
    %v349 = vrot.slane %v348, 1
    %v350 = vadd.f32 %v348, %v349
    %v351 = vmul.f32 %v343, 0.125
    %v352 = vmul.f32 %v350, 0.125
    %v353 = vmul.f32 %v351, %v351
    %v354 = vsub.f32 %v352, %v353
    %v355 = vmax.f32 %v354, 0.0
    %v356 = vld [vmem:[%s7] sm:$0x1]
    %v357 = vadd.f32 %v355, 1e-05
    %v358 = vrsqrt.pop %v357
    %v359 = vmul.f32 %v356, %v358
    %v360 = vld [vmem:[%s8] sm:$0x1]
    %v361 = vmul.f32 %v351, %v359
    %v362 = vsub.f32 %v360, %v361
    %v364 = vlaneseq
    %v365 = vshrl.u32 %v364, 7
    %v366 = vsub.s32 0, %v365
    %v367 = vrot.slane %v359, %v366
    %v369 = vmul.f32 %v337, %v367
    %v371 = vlaneseq
    %v372 = vshrl.u32 %v371, 7
    %v373 = vsub.s32 0, %v372
    %v374 = vrot.slane %v362, %v373
    %v376 = vadd.f32 %v369, %v374
    %vm377 = vcmask 130048
    %378 = vst.msk [vmem:[#allocation8] sm:$0xff] %vm377, %v376
    // Predicated region
    $region50: #{tpu_custom_call.1} parent=1 // pred_check
      _
    $region51: #{tpu_custom_call.1} parent=1 // pred_check_branch
      %380 = sbr.rel (0) target = $region53
    $region52: #{tpu_custom_call.1} parent=1 // pred_region
      %s382 = ssub.s32 128, 128
      %383 = vsyncadd [#allocation4], %s382
      %s385 = sshll.u32 [#allocation8], 4
      %s386 = int_to_ptr.vmem [resolvable:$true] %s385
      %388 = dma.vmem_to_hbm [thread:$0]  %s386, 128, %s9, [#allocation4]
    $region53: #{tpu_custom_call.1} parent=1 // pred_fallthru
      _
    // Predicated region
    $region54: #{tpu_custom_call.1} parent=1 // pred_check
      _
    $region55: #{tpu_custom_call.1} parent=1 // pred_check_branch
      %390 = sbr.rel (0) target = $region57
    $region56: #{tpu_custom_call.1} parent=1 // pred_region
      %391 = dma.done [#allocation4], 128
    $region57: #{tpu_custom_call.1} parent=1 // pred_fallthru
      _
    %392 = vsyncpa [#allocation3], 1
    %393 = vsyncpa [#allocation6], 1
    %394 = vsyncpa [#allocation4], 1

</llo_original>
